<compile_context>
chip_gen: v5e
topology: v5e:2x2
jax: 0.10.0
libtpu: 0.0.40
codegen_flags: <defaults>
</compile_context>

<pallas_src>
import jax
import jax.numpy as jnp
from jax import lax
from jax.experimental import pallas as pl
from jax.experimental.pallas import tpu as pltpu

# --- module constants (globals from the PyTorch file) ---
CONTROL_PLANE_DIM = 64
STATE_DIM = 128          # RNN hidden size (state_matrix_dim == state_dim)
WINDOW_SIZE = 128        # out_proj output size
INPUT_DIM = WINDOW_SIZE  # input_dim == window_size in the original usage

# small, consistent demo problem size
BATCH = 2
N_FRAMES = 8             # n_samples = N_FRAMES * INPUT_DIM = 1024


def _ssm_kernel(ctrl_ref, w_in_ref, w_hh_t_ref, w_out_t_ref, out_ref, hs_ref):
    """Whole problem in one invocation; hidden state lives in vregs.

    ctrl_ref   : (B, CPD, F) f32   control signal, channels-major (as produced by the model)
    w_in_ref   : (CPD, H)    bf16  fused  proj @ W_ih^T
    w_hh_t_ref : (H, H)      bf16  RNN recurrent weight, transposed
    w_out_t_ref: (H, W)      bf16  output projection, transposed
    out_ref    : (B, F, W)   f32   sin(out_proj(rnn(...)))
    hs_ref     : (B, F, H)   f32   VMEM scratch holding all hidden states
    """
    B, CPD, F = ctrl_ref.shape
    H = w_hh_t_ref.shape[0]
    W = w_out_t_ref.shape[1]

    # --- input path (all frames / all batches at once; off the serial chain) ---
    # (B, CPD, F) -> (B, F, CPD) -> (B*F, CPD); tiny in-kernel XLU transpose, so the
    # wrapper emits no standalone transpose HLO.
    ctrl = jnp.transpose(ctrl_ref[...], (0, 2, 1))                 # (B, F, CPD) f32
    ctrl2d = ctrl.reshape(B * F, CPD).astype(jnp.bfloat16)         # (B*F, CPD) bf16
    # fused input projection + RNN input weight:  u = (ctrl @ proj) @ W_ih^T = ctrl @ W_in
    u = jnp.dot(ctrl2d, w_in_ref[...],
                preferred_element_type=jnp.float32).reshape(B, F, H)   # (B, F, H) f32

    w_hh_t = w_hh_t_ref[...]                                       # (H, H) bf16

    # --- batched tanh recurrence, fully unrolled (F static); h stays in vregs ---
    # h_0 = 0 (nn.RNN default) -> step 0 has no recurrent matmul.
    h = jnp.tanh(u[:, 0, :])                                       # (B, H) f32
    hs_ref[:, 0:1, :] = h[:, None, :]
    for t in range(1, F):
        rec = jnp.dot(h.astype(jnp.bfloat16), w_hh_t,
                      preferred_element_type=jnp.float32)          # (B, H) f32
        h = jnp.tanh(u[:, t, :] + rec)
        hs_ref[:, t:t + 1, :] = h[:, None, :]                      # direct row placement

    # --- out_proj + sin: one (B*F, H) @ (H, W) matmul, one full-tile store ---
    hs = hs_ref[...].astype(jnp.bfloat16).reshape(B * F, H)
    out = jnp.dot(hs, w_out_t_ref[...], preferred_element_type=jnp.float32)
    out_ref[...] = jnp.sin(out).reshape(B, F, W)


def prepare_ssm_params(proj, w_ih, w_hh, w_out):
    """One-time weight preparation (kept OUT of the per-call jitted path):
       fuse proj @ W_ih^T in f32, transpose for row-major in-kernel matmuls,
       and cast MXU operands to bf16."""
    w_in = jnp.dot(proj, w_ih.T).astype(jnp.bfloat16)     # (CPD, H)
    w_hh_t = jnp.asarray(w_hh).T.astype(jnp.bfloat16)     # (H, H)
    w_out_t = jnp.asarray(w_out).T.astype(jnp.bfloat16)   # (H, W)
    return w_in, w_hh_t, w_out_t


@jax.jit
def overfit_control_plane_forward(sig, w_in, w_hh_t, w_out_t):
    """sig: (B, CPD, F) f32 -> audio: (B, 1, F * WINDOW_SIZE) f32."""
    B, CPD, F = sig.shape
    H = w_hh_t.shape[0]
    W = w_out_t.shape[1]

    flops = 2 * B * F * (CPD * H + H * H + H * W)
    transcendentals = B * F * (H + W)                     # tanh + sin
    bytes_accessed = (B * CPD * F * 4                     # signal (f32, read once)
                      + (CPD * H + H * H + H * W) * 2     # bf16 weights (read once)
                      + B * F * W * 4)                    # f32 output

    out = pl.pallas_call(
        _ssm_kernel,
        out_shape=jax.ShapeDtypeStruct((B, F, W), jnp.float32),
        scratch_shapes=[pltpu.VMEM((B, F, H), jnp.float32)],
        cost_estimate=pl.CostEstimate(
            flops=flops,
            transcendentals=transcendentals,
            bytes_accessed=bytes_accessed),
    )(sig, w_in, w_hh_t, w_out_t)

    return out.reshape(B, 1, F * W)


def _reference_forward(sig, proj, w_ih, w_hh, w_out):
    """Pure-JAX f32 reference matching the PyTorch SSM.forward."""
    ctrl = jnp.transpose(sig, (0, 2, 1))                 # (B, F, CPD)
    x = ctrl @ proj                                      # (B, F, D)

    def step(h, x_t):
        h_new = jnp.tanh(x_t @ w_ih.T + h @ w_hh.T)      # (B, H)
        return h_new, h_new

    h0 = jnp.zeros((sig.shape[0], w_hh.shape[0]), jnp.float32)
    _, hs = lax.scan(step, h0, jnp.transpose(x, (1, 0, 2)))   # (F, B, H)
    hs = jnp.transpose(hs, (1, 0, 2))                    # (B, F, H)
    out = hs @ w_out.T                                   # (B, F, W)
    return jnp.sin(out.reshape(sig.shape[0], 1, -1))


if __name__ == "__main__":
    key = jax.random.PRNGKey(0)
    k_sig, k_proj, k_ih, k_hh, k_out = jax.random.split(key, 5)

    # deterministic "make_initializer(0.05)"-style uniform init
    init = lambda k, shape, lim: jax.random.uniform(
        k, shape, jnp.float32, minval=-lim, maxval=lim)

    proj = init(k_proj, (CONTROL_PLANE_DIM, INPUT_DIM), 0.05)    # control -> input
    w_ih = init(k_ih, (STATE_DIM, INPUT_DIM), 0.05)              # RNN weight_ih_l0
    w_hh = init(k_hh, (STATE_DIM, STATE_DIM), 0.05)              # RNN weight_hh_l0
    w_out = init(k_out, (WINDOW_SIZE, STATE_DIM), 0.05)          # out_proj.weight

    # sparse-ish non-negative control signal, like OverfitControlPlane.control
    sig = jax.random.uniform(k_sig, (BATCH, CONTROL_PLANE_DIM, N_FRAMES),
                             jnp.float32, minval=0.0, maxval=0.1)

    # one-time parameter prep (fusion / transpose / bf16 cast) -- not per call
    w_in, w_hh_t, w_out_t = prepare_ssm_params(proj, w_ih, w_hh, w_out)
    jax.block_until_ready((w_in, w_hh_t, w_out_t))

    audio = overfit_control_plane_forward(sig, w_in, w_hh_t, w_out_t)
    audio = jax.block_until_ready(audio)

    ref = _reference_forward(sig, proj, w_ih, w_hh, w_out)
    assert audio.shape == (BATCH, 1, N_FRAMES * WINDOW_SIZE), audio.shape
    # bf16 MXU operands (f32 accumulation) -> relaxed tolerance vs f32 reference
    assert jnp.allclose(audio, ref, atol=2e-3, rtol=2e-2), "mismatch vs reference"

    # TODO(synk): sparsify/top-k + relu on the learned `control` parameter and the
    # Adam training loop are outside the forward pass and are not implemented here.

    print("KERNEL_OK")
</pallas_src>

<mosaic_0001>
module attributes {stable_mosaic.version = 11 : i64} {
  func.func @_ssm_kernel(%arg0: memref<2x64x8xf32, #tpu.memory_space<vmem>>, %arg1: memref<64x128xbf16, #tpu.memory_space<vmem>>, %arg2: memref<128x128xbf16, #tpu.memory_space<vmem>>, %arg3: memref<128x128xbf16, #tpu.memory_space<vmem>>, %arg4: memref<2x8x128xf32, #tpu.memory_space<vmem>>, %arg5: memref<2x8x128xf32, #tpu.memory_space<vmem>>) attributes {dimension_semantics = [], scalar_prefetch = 0 : i64, scratch_operands = 1 : i64, tpu.core_type = #tpu.core_type<tc>} {
    %c0 = arith.constant 0 : index
    %c0_0 = arith.constant 0 : index
    %c0_1 = arith.constant 0 : index
    %0 = vector.load %arg0[%c0, %c0_0, %c0_1] : memref<2x64x8xf32, #tpu.memory_space<vmem>>, vector<2x64x8xf32>
    %1 = tpu.transpose %0, [0, 2, 1] : vector<2x64x8xf32> -> vector<2x8x64xf32>
    %2 = vector.shape_cast %1 : vector<2x8x64xf32> to vector<16x64xf32>
    %3 = arith.truncf %2 : vector<16x64xf32> to vector<16x64xbf16>
    %c0_2 = arith.constant 0 : index
    %c0_3 = arith.constant 0 : index
    %4 = vector.load %arg1[%c0_2, %c0_3] : memref<64x128xbf16, #tpu.memory_space<vmem>>, vector<64x128xbf16>
    %cst = arith.constant dense<0.000000e+00> : vector<16x128xf32>
    %5 = tpu.matmul %3, %4, %cst {dimension_numbers = #tpu.dot_dimension_numbers<[1], [0], [0], [1], [0, 0, 1, 1], [], []>} : vector<16x64xbf16>, vector<64x128xbf16>, vector<16x128xf32> -> vector<16x128xf32>
    %6 = vector.shape_cast %5 : vector<16x128xf32> to vector<2x8x128xf32>
    %c0_4 = arith.constant 0 : index
    %c0_5 = arith.constant 0 : index
    %7 = vector.load %arg2[%c0_4, %c0_5] : memref<128x128xbf16, #tpu.memory_space<vmem>>, vector<128x128xbf16>
    %8 = vector.extract_strided_slice %6 {offsets = [0, 0, 0], sizes = [2, 1, 128], strides = [1, 1, 1]} : vector<2x8x128xf32> to vector<2x1x128xf32>
    %9 = vector.shape_cast %8 : vector<2x1x128xf32> to vector<2x128xf32>
    %10 = math.tanh %9 : vector<2x128xf32>
    %11 = vector.shape_cast %10 : vector<2x128xf32> to vector<2x1x128xf32>
    %c0_6 = arith.constant 0 : index
    %c0_7 = arith.constant 0 : index
    %c0_8 = arith.constant 0 : index
    %12 = vector.load %arg5[%c0_6, %c0_7, %c0_8] : memref<2x8x128xf32, #tpu.memory_space<vmem>>, vector<2x1x128xf32>
    tpu.vector_store %arg5[%c0_6, %c0_7, %c0_8], %11 {strides = array<i32>} : memref<2x8x128xf32, #tpu.memory_space<vmem>>, vector<2x1x128xf32>,
    %13 = arith.truncf %10 : vector<2x128xf32> to vector<2x128xbf16>
    %cst_9 = arith.constant dense<0.000000e+00> : vector<2x128xf32>
    %14 = tpu.matmul %13, %7, %cst_9 {dimension_numbers = #tpu.dot_dimension_numbers<[1], [0], [0], [1], [0, 0, 1, 1], [], []>} : vector<2x128xbf16>, vector<128x128xbf16>, vector<2x128xf32> -> vector<2x128xf32>
    %15 = vector.extract_strided_slice %6 {offsets = [0, 1, 0], sizes = [2, 1, 128], strides = [1, 1, 1]} : vector<2x8x128xf32> to vector<2x1x128xf32>
    %16 = vector.shape_cast %15 : vector<2x1x128xf32> to vector<2x128xf32>
    %17 = arith.addf %16, %14 : vector<2x128xf32>
    %18 = math.tanh %17 : vector<2x128xf32>
    %19 = vector.shape_cast %18 : vector<2x128xf32> to vector<2x1x128xf32>
    %c0_10 = arith.constant 0 : index
    %c1 = arith.constant 1 : index
    %c0_11 = arith.constant 0 : index
    %20 = vector.load %arg5[%c0_10, %c1, %c0_11] : memref<2x8x128xf32, #tpu.memory_space<vmem>>, vector<2x1x128xf32>
    tpu.vector_store %arg5[%c0_10, %c1, %c0_11], %19 {strides = array<i32>} : memref<2x8x128xf32, #tpu.memory_space<vmem>>, vector<2x1x128xf32>,
    %21 = arith.truncf %18 : vector<2x128xf32> to vector<2x128xbf16>
    %cst_12 = arith.constant dense<0.000000e+00> : vector<2x128xf32>
    %22 = tpu.matmul %21, %7, %cst_12 {dimension_numbers = #tpu.dot_dimension_numbers<[1], [0], [0], [1], [0, 0, 1, 1], [], []>} : vector<2x128xbf16>, vector<128x128xbf16>, vector<2x128xf32> -> vector<2x128xf32>
    %23 = vector.extract_strided_slice %6 {offsets = [0, 2, 0], sizes = [2, 1, 128], strides = [1, 1, 1]} : vector<2x8x128xf32> to vector<2x1x128xf32>
    %24 = vector.shape_cast %23 : vector<2x1x128xf32> to vector<2x128xf32>
    %25 = arith.addf %24, %22 : vector<2x128xf32>
    %26 = math.tanh %25 : vector<2x128xf32>
    %27 = vector.shape_cast %26 : vector<2x128xf32> to vector<2x1x128xf32>
    %c0_13 = arith.constant 0 : index
    %c2 = arith.constant 2 : index
    %c0_14 = arith.constant 0 : index
    %28 = vector.load %arg5[%c0_13, %c2, %c0_14] : memref<2x8x128xf32, #tpu.memory_space<vmem>>, vector<2x1x128xf32>
    tpu.vector_store %arg5[%c0_13, %c2, %c0_14], %27 {strides = array<i32>} : memref<2x8x128xf32, #tpu.memory_space<vmem>>, vector<2x1x128xf32>,
    %29 = arith.truncf %26 : vector<2x128xf32> to vector<2x128xbf16>
    %cst_15 = arith.constant dense<0.000000e+00> : vector<2x128xf32>
    %30 = tpu.matmul %29, %7, %cst_15 {dimension_numbers = #tpu.dot_dimension_numbers<[1], [0], [0], [1], [0, 0, 1, 1], [], []>} : vector<2x128xbf16>, vector<128x128xbf16>, vector<2x128xf32> -> vector<2x128xf32>
    %31 = vector.extract_strided_slice %6 {offsets = [0, 3, 0], sizes = [2, 1, 128], strides = [1, 1, 1]} : vector<2x8x128xf32> to vector<2x1x128xf32>
    %32 = vector.shape_cast %31 : vector<2x1x128xf32> to vector<2x128xf32>
    %33 = arith.addf %32, %30 : vector<2x128xf32>
    %34 = math.tanh %33 : vector<2x128xf32>
    %35 = vector.shape_cast %34 : vector<2x128xf32> to vector<2x1x128xf32>
    %c0_16 = arith.constant 0 : index
    %c3 = arith.constant 3 : index
    %c0_17 = arith.constant 0 : index
    %36 = vector.load %arg5[%c0_16, %c3, %c0_17] : memref<2x8x128xf32, #tpu.memory_space<vmem>>, vector<2x1x128xf32>
    tpu.vector_store %arg5[%c0_16, %c3, %c0_17], %35 {strides = array<i32>} : memref<2x8x128xf32, #tpu.memory_space<vmem>>, vector<2x1x128xf32>,
    %37 = arith.truncf %34 : vector<2x128xf32> to vector<2x128xbf16>
    %cst_18 = arith.constant dense<0.000000e+00> : vector<2x128xf32>
    %38 = tpu.matmul %37, %7, %cst_18 {dimension_numbers = #tpu.dot_dimension_numbers<[1], [0], [0], [1], [0, 0, 1, 1], [], []>} : vector<2x128xbf16>, vector<128x128xbf16>, vector<2x128xf32> -> vector<2x128xf32>
    %39 = vector.extract_strided_slice %6 {offsets = [0, 4, 0], sizes = [2, 1, 128], strides = [1, 1, 1]} : vector<2x8x128xf32> to vector<2x1x128xf32>
    %40 = vector.shape_cast %39 : vector<2x1x128xf32> to vector<2x128xf32>
    %41 = arith.addf %40, %38 : vector<2x128xf32>
    %42 = math.tanh %41 : vector<2x128xf32>
    %43 = vector.shape_cast %42 : vector<2x128xf32> to vector<2x1x128xf32>
    %c0_19 = arith.constant 0 : index
    %c4 = arith.constant 4 : index
    %c0_20 = arith.constant 0 : index
    %44 = vector.load %arg5[%c0_19, %c4, %c0_20] : memref<2x8x128xf32, #tpu.memory_space<vmem>>, vector<2x1x128xf32>
    tpu.vector_store %arg5[%c0_19, %c4, %c0_20], %43 {strides = array<i32>} : memref<2x8x128xf32, #tpu.memory_space<vmem>>, vector<2x1x128xf32>,
    %45 = arith.truncf %42 : vector<2x128xf32> to vector<2x128xbf16>
    %cst_21 = arith.constant dense<0.000000e+00> : vector<2x128xf32>
    %46 = tpu.matmul %45, %7, %cst_21 {dimension_numbers = #tpu.dot_dimension_numbers<[1], [0], [0], [1], [0, 0, 1, 1], [], []>} : vector<2x128xbf16>, vector<128x128xbf16>, vector<2x128xf32> -> vector<2x128xf32>
    %47 = vector.extract_strided_slice %6 {offsets = [0, 5, 0], sizes = [2, 1, 128], strides = [1, 1, 1]} : vector<2x8x128xf32> to vector<2x1x128xf32>
    %48 = vector.shape_cast %47 : vector<2x1x128xf32> to vector<2x128xf32>
    %49 = arith.addf %48, %46 : vector<2x128xf32>
    %50 = math.tanh %49 : vector<2x128xf32>
    %51 = vector.shape_cast %50 : vector<2x128xf32> to vector<2x1x128xf32>
    %c0_22 = arith.constant 0 : index
    %c5 = arith.constant 5 : index
    %c0_23 = arith.constant 0 : index
    %52 = vector.load %arg5[%c0_22, %c5, %c0_23] : memref<2x8x128xf32, #tpu.memory_space<vmem>>, vector<2x1x128xf32>
    tpu.vector_store %arg5[%c0_22, %c5, %c0_23], %51 {strides = array<i32>} : memref<2x8x128xf32, #tpu.memory_space<vmem>>, vector<2x1x128xf32>,
    %53 = arith.truncf %50 : vector<2x128xf32> to vector<2x128xbf16>
    %cst_24 = arith.constant dense<0.000000e+00> : vector<2x128xf32>
    %54 = tpu.matmul %53, %7, %cst_24 {dimension_numbers = #tpu.dot_dimension_numbers<[1], [0], [0], [1], [0, 0, 1, 1], [], []>} : vector<2x128xbf16>, vector<128x128xbf16>, vector<2x128xf32> -> vector<2x128xf32>
    %55 = vector.extract_strided_slice %6 {offsets = [0, 6, 0], sizes = [2, 1, 128], strides = [1, 1, 1]} : vector<2x8x128xf32> to vector<2x1x128xf32>
    %56 = vector.shape_cast %55 : vector<2x1x128xf32> to vector<2x128xf32>
    %57 = arith.addf %56, %54 : vector<2x128xf32>
    %58 = math.tanh %57 : vector<2x128xf32>
    %59 = vector.shape_cast %58 : vector<2x128xf32> to vector<2x1x128xf32>
    %c0_25 = arith.constant 0 : index
    %c6 = arith.constant 6 : index
    %c0_26 = arith.constant 0 : index
    %60 = vector.load %arg5[%c0_25, %c6, %c0_26] : memref<2x8x128xf32, #tpu.memory_space<vmem>>, vector<2x1x128xf32>
    tpu.vector_store %arg5[%c0_25, %c6, %c0_26], %59 {strides = array<i32>} : memref<2x8x128xf32, #tpu.memory_space<vmem>>, vector<2x1x128xf32>,
    %61 = arith.truncf %58 : vector<2x128xf32> to vector<2x128xbf16>
    %cst_27 = arith.constant dense<0.000000e+00> : vector<2x128xf32>
    %62 = tpu.matmul %61, %7, %cst_27 {dimension_numbers = #tpu.dot_dimension_numbers<[1], [0], [0], [1], [0, 0, 1, 1], [], []>} : vector<2x128xbf16>, vector<128x128xbf16>, vector<2x128xf32> -> vector<2x128xf32>
    %63 = vector.extract_strided_slice %6 {offsets = [0, 7, 0], sizes = [2, 1, 128], strides = [1, 1, 1]} : vector<2x8x128xf32> to vector<2x1x128xf32>
    %64 = vector.shape_cast %63 : vector<2x1x128xf32> to vector<2x128xf32>
    %65 = arith.addf %64, %62 : vector<2x128xf32>
    %66 = math.tanh %65 : vector<2x128xf32>
    %67 = vector.shape_cast %66 : vector<2x128xf32> to vector<2x1x128xf32>
    %c0_28 = arith.constant 0 : index
    %c7 = arith.constant 7 : index
    %c0_29 = arith.constant 0 : index
    %68 = vector.load %arg5[%c0_28, %c7, %c0_29] : memref<2x8x128xf32, #tpu.memory_space<vmem>>, vector<2x1x128xf32>
    tpu.vector_store %arg5[%c0_28, %c7, %c0_29], %67 {strides = array<i32>} : memref<2x8x128xf32, #tpu.memory_space<vmem>>, vector<2x1x128xf32>,
    %c0_30 = arith.constant 0 : index
    %c0_31 = arith.constant 0 : index
    %c0_32 = arith.constant 0 : index
    %69 = vector.load %arg5[%c0_30, %c0_31, %c0_32] : memref<2x8x128xf32, #tpu.memory_space<vmem>>, vector<2x8x128xf32>
    %70 = arith.truncf %69 : vector<2x8x128xf32> to vector<2x8x128xbf16>
    %71 = vector.shape_cast %70 : vector<2x8x128xbf16> to vector<16x128xbf16>
    %c0_33 = arith.constant 0 : index
    %c0_34 = arith.constant 0 : index
    %72 = vector.load %arg3[%c0_33, %c0_34] : memref<128x128xbf16, #tpu.memory_space<vmem>>, vector<128x128xbf16>
    %cst_35 = arith.constant dense<0.000000e+00> : vector<16x128xf32>
    %73 = tpu.matmul %71, %72, %cst_35 {dimension_numbers = #tpu.dot_dimension_numbers<[1], [0], [0], [1], [0, 0, 1, 1], [], []>} : vector<16x128xbf16>, vector<128x128xbf16>, vector<16x128xf32> -> vector<16x128xf32>
    %74 = math.sin %73 : vector<16x128xf32>
    %75 = vector.shape_cast %74 : vector<16x128xf32> to vector<2x8x128xf32>
    %c0_36 = arith.constant 0 : index
    %c0_37 = arith.constant 0 : index
    %c0_38 = arith.constant 0 : index
    %76 = vector.load %arg4[%c0_36, %c0_37, %c0_38] : memref<2x8x128xf32, #tpu.memory_space<vmem>>, vector<2x8x128xf32>
    tpu.vector_store %arg4[%c0_36, %c0_37, %c0_38], %75 {strides = array<i32>} : memref<2x8x128xf32, #tpu.memory_space<vmem>>, vector<2x8x128xf32>,
    return
  }
}

</mosaic_0001>

<llo_original>
// kernel: overfit_control_plane_forward.1
$region0: #{overfit_control_plane_forward.1}
  #allocation0 [shape = 'u32[]', space=smem, size = 0x4, offset = 0x4, fixed_abs, tag = 'smem constant byte address 0x4 - core index']
  #allocation1 [shape = 'u32[72,128]{1,0:T(1,128)}', space=vmem, size = 0x9000, scoped, tag = 'internal scratch']
  #allocation2 [shape = 'f32[2,8,128]{2,1,0:T(8,128)}', space=vmem, size = 0x2000, scoped, tag = 'scratch operand']
  %s0 = inlined_call_operand.vmem [shape: f32[2,64,8], index: 0, kind: input, shape index: {}]
  %s1 = inlined_call_operand.hbm [shape: bf16[64,128], index: 1, kind: input, shape index: {}]
  %s2 = inlined_call_operand.vmem [shape: bf16[128,128], index: 2, kind: input, shape index: {}]
  %s3 = inlined_call_operand.vmem [shape: bf16[128,128], index: 3, kind: input, shape index: {}]
  %s4 = inlined_call_operand.hbm [shape: f32[2,8,128], index: 4, kind: output, shape index: {}]
  %s5 = sld [smem:[#allocation0]]
  $region30: #{overfit_control_plane_forward.1} parent=0
    _
  %s7 = ssub.s32 1, %s5
  %s8 = scalar_select 0, %s7, %s5
  $region1: #{overfit_control_plane_forward.1} parent=0
    #allocation3 [shape = 'u8[16384]{0}', space=vmem, size = 0x4000, scoped, tag = 'input window, operand 1, single buffered']
    #allocation4 [shape = 's32[1]{0}', space=sflag, size = 0x4, scoped, tag = 'scoped memory for overfit_control_plane_forward.1']
    #allocation5 [shape = 's32[1]{0}', space=sflag, size = 0x4, scoped, tag = 'scoped memory for overfit_control_plane_forward.1']
    #allocation6 [shape = 'u8[8192]{0}', space=vmem, size = 0x2000, scoped, tag = 'output window, operand 0, single buffered']
    %9 = vsyncpa [#allocation4], 0
    %10 = vsyncpa [#allocation5], 0
    // Predicated region
    $region2: #{overfit_control_plane_forward.1} parent=1 // pred_check
      _
    $region3: #{overfit_control_plane_forward.1} parent=1 // pred_check_branch
      %12 = sbr.rel (0) target = $region5
    $region4: #{overfit_control_plane_forward.1} parent=1 // pred_region
      _
    $region5: #{overfit_control_plane_forward.1} parent=1 // pred_fallthru
      _
    // Predicated region
    $region6: #{overfit_control_plane_forward.1} parent=1 // pred_check
      _
    $region7: #{overfit_control_plane_forward.1} parent=1 // pred_check_branch
      %14 = sbr.rel (0) target = $region9
    $region8: #{overfit_control_plane_forward.1} parent=1 // pred_region
      %16 = vsyncadd [#allocation4], 0
      %s17 = sshll.u32 %s1, 4
      %s18 = int_to_ptr.hbm [resolvable:$true] %s17
      %s19 = sshll.u32 [#allocation3], 4
      %s20 = int_to_ptr.vmem [resolvable:$true] %s19
      %25 = dma.hbm_to_vmem [thread:$0]  %s18, 512, %s20, [#allocation4], 64, 64, 4
    $region9: #{overfit_control_plane_forward.1} parent=1 // pred_fallthru
      _
    // Predicated region
    $region10: #{overfit_control_plane_forward.1} parent=1 // pred_check
      _
    $region11: #{overfit_control_plane_forward.1} parent=1 // pred_check_branch
      %27 = sbr.rel (0) target = $region13
    $region12: #{overfit_control_plane_forward.1} parent=1 // pred_region
      _
    $region13: #{overfit_control_plane_forward.1} parent=1 // pred_fallthru
      _
    // Predicated region
    $region14: #{overfit_control_plane_forward.1} parent=1 // pred_check
      _
    $region15: #{overfit_control_plane_forward.1} parent=1 // pred_check_branch
      %29 = sbr.rel (0) target = $region17
    $region16: #{overfit_control_plane_forward.1} parent=1 // pred_region
      _
    $region17: #{overfit_control_plane_forward.1} parent=1 // pred_fallthru
      _
    // Predicated region
    $region18: #{overfit_control_plane_forward.1} parent=1 // pred_check
      _
    $region19: #{overfit_control_plane_forward.1} parent=1 // pred_check_branch
      %31 = sbr.rel (0) target = $region21
    $region20: #{overfit_control_plane_forward.1} parent=1 // pred_region
      %33 = dma.done [#allocation4], 512
    $region21: #{overfit_control_plane_forward.1} parent=1 // pred_fallthru
      _
    %v35 = vld [vmem:[%s0] sm:$0xff]
    %v36 = vld [vmem:[%s0 + $0x8] sm:$0xff]
    %v37 = vld [vmem:[%s0 + $0x10] sm:$0xff]
    %v38 = vld [vmem:[%s0 + $0x18] sm:$0xff]
    %v39 = vld [vmem:[%s0 + $0x20] sm:$0xff]
    %v40 = vld [vmem:[%s0 + $0x28] sm:$0xff]
    %v41 = vld [vmem:[%s0 + $0x30] sm:$0xff]
    %v42 = vld [vmem:[%s0 + $0x38] sm:$0xff]
    %v43 = vld [vmem:[%s0 + $0x40] sm:$0xff]
    %v44 = vld [vmem:[%s0 + $0x48] sm:$0xff]
    %v45 = vld [vmem:[%s0 + $0x50] sm:$0xff]
    %v46 = vld [vmem:[%s0 + $0x58] sm:$0xff]
    %v47 = vld [vmem:[%s0 + $0x60] sm:$0xff]
    %v48 = vld [vmem:[%s0 + $0x68] sm:$0xff]
    %v49 = vld [vmem:[%s0 + $0x70] sm:$0xff]
    %v50 = vld [vmem:[%s0 + $0x78] sm:$0xff]
    %51 = vxpose.xlu0.b32.start [1/16] %v35, 128
    %52 = vxpose.xlu0.b32.cont [2/16] %v36, 128
    %53 = vxpose.xlu0.b32.cont [3/16] %v37, 128
    %54 = vxpose.xlu0.b32.cont [4/16] %v38, 128
    %55 = vxpose.xlu0.b32.cont [5/16] %v39, 128
    %56 = vxpose.xlu0.b32.cont [6/16] %v40, 128
    %57 = vxpose.xlu0.b32.cont [7/16] %v41, 128
    %58 = vxpose.xlu0.b32.cont [8/16] %v42, 128
    %59 = vxpose.xlu0.b32.cont [9/16] 0.0, 128
    %60 = vxpose.xlu0.b32.cont [10/16] 0.0, 128
    %61 = vxpose.xlu0.b32.cont [11/16] 0.0, 128
    %62 = vxpose.xlu0.b32.cont [12/16] 0.0, 128
    %63 = vxpose.xlu0.b32.cont [13/16] 0.0, 128
    %64 = vxpose.xlu0.b32.cont [14/16] 0.0, 128
    %65 = vxpose.xlu0.b32.cont [15/16] 0.0, 128
    %66 = vxpose.xlu0.b32.end [16/16] 0.0, 128
    %v67 = vpop.trf.xlu0
    %v68 = vpop.trf.xlu0
    %v69 = vpop.trf.xlu0
    %v70 = vpop.trf.xlu0
    %v71 = vpop.trf.xlu0
    %v72 = vpop.trf.xlu0
    %v73 = vpop.trf.xlu0
    %v74 = vpop.trf.xlu0
    %v75 = vpop.trf.xlu0
    %v76 = vpop.trf.xlu0
    %v77 = vpop.trf.xlu0
    %v78 = vpop.trf.xlu0
    %v79 = vpop.trf.xlu0
    %v80 = vpop.trf.xlu0
    %v81 = vpop.trf.xlu0
    %v82 = vpop.trf.xlu0
    %83 = vxpose.xlu0.b32.start [1/16] %v43, 128
    %84 = vxpose.xlu0.b32.cont [2/16] %v44, 128
    %85 = vxpose.xlu0.b32.cont [3/16] %v45, 128
    %86 = vxpose.xlu0.b32.cont [4/16] %v46, 128
    %87 = vxpose.xlu0.b32.cont [5/16] %v47, 128
    %88 = vxpose.xlu0.b32.cont [6/16] %v48, 128
    %89 = vxpose.xlu0.b32.cont [7/16] %v49, 128
    %90 = vxpose.xlu0.b32.cont [8/16] %v50, 128
    %91 = vxpose.xlu0.b32.cont [9/16] 0.0, 128
    %92 = vxpose.xlu0.b32.cont [10/16] 0.0, 128
    %93 = vxpose.xlu0.b32.cont [11/16] 0.0, 128
    %94 = vxpose.xlu0.b32.cont [12/16] 0.0, 128
    %95 = vxpose.xlu0.b32.cont [13/16] 0.0, 128
    %96 = vxpose.xlu0.b32.cont [14/16] 0.0, 128
    %97 = vxpose.xlu0.b32.cont [15/16] 0.0, 128
    %98 = vxpose.xlu0.b32.end [16/16] 0.0, 128
    %v99 = vpop.trf.xlu0
    %v100 = vpop.trf.xlu0
    %v101 = vpop.trf.xlu0
    %v102 = vpop.trf.xlu0
    %v103 = vpop.trf.xlu0
    %v104 = vpop.trf.xlu0
    %v105 = vpop.trf.xlu0
    %v106 = vpop.trf.xlu0
    %v107 = vpop.trf.xlu0
    %v108 = vpop.trf.xlu0
    %v109 = vpop.trf.xlu0
    %v110 = vpop.trf.xlu0
    %v111 = vpop.trf.xlu0
    %v112 = vpop.trf.xlu0
    %v113 = vpop.trf.xlu0
    %v114 = vpop.trf.xlu0
    %v115 = vpack.c.bf16 %v99, %v67
    %v116 = vld [vmem:[#allocation3] sm:$0xf]
    %v117 = vld [vmem:[#allocation3 + $0x4] sm:$0xf]
    %v118 = vld [vmem:[#allocation3 + $0x8] sm:$0xf]
    %v119 = vld [vmem:[#allocation3 + $0xc] sm:$0xf]
    %v120 = vld [vmem:[#allocation3 + $0x10] sm:$0xf]
    %v121 = vld [vmem:[#allocation3 + $0x14] sm:$0xf]
    %v122 = vld [vmem:[#allocation3 + $0x18] sm:$0xf]
    %v123 = vld [vmem:[#allocation3 + $0x1c] sm:$0xf]
    %v132 = vunpack.c.l.b16 %v116
    %v133 = vunpack.c.l.b16 %v117
    %v134 = vunpack.c.l.b16 %v118
    %v135 = vunpack.c.l.b16 %v119
    %v136 = vunpack.c.l.b16 %v120
    %v137 = vunpack.c.l.b16 %v121
    %v138 = vunpack.c.l.b16 %v122
    %v139 = vunpack.c.l.b16 %v123
    %v140 = vpack.c.b16 %v133, %v132
    %v141 = vpack.c.b16 %v135, %v134
    %v142 = vpack.c.b16 %v137, %v136
    %v143 = vpack.c.b16 %v139, %v138
    %vm148 = vcmask 523264
    %v150 = vsel %vm148, %v115, 0
    %152 = vmatpush.bf16.msra.mxu0 0
    %153 = vmatpush.bf16.msra.mxu0 0
    %154 = vmatpush.bf16.msra.mxu0 0
    %155 = vmatpush.bf16.msra.mxu0 0
    %156 = vmatpush.bf16.msra.mxu0 %v143
    %157 = vmatpush.bf16.msra.mxu0 %v142
    %158 = vmatpush.bf16.msra.mxu0 %v141
    %159 = vmatpush.bf16.msra.mxu0 %v140
    %160 = vmatmul.bf16.gmra.mxu0 %v150
    %v161 = vpop.f32.mrf.mxu0
    %v162 = vadd.f32 0.0, %v161
    %v163 = vpop.f32.mrf.mxu0
    %v164 = vadd.f32 0.0, %v163
    %165 = vdwg.mxu0
    %v166 = vld [vmem:[%s2] sm:$0xf]
    %v167 = vld [vmem:[%s2 + $0x4] sm:$0xf]
    %v168 = vld [vmem:[%s2 + $0x8] sm:$0xf]
    %v169 = vld [vmem:[%s2 + $0xc] sm:$0xf]
    %v170 = vld [vmem:[%s2 + $0x10] sm:$0xf]
    %v171 = vld [vmem:[%s2 + $0x14] sm:$0xf]
    %v172 = vld [vmem:[%s2 + $0x18] sm:$0xf]
    %v173 = vld [vmem:[%s2 + $0x1c] sm:$0xf]
    %v174 = vld [vmem:[%s2 + $0x20] sm:$0xf]
    %v175 = vld [vmem:[%s2 + $0x24] sm:$0xf]
    %v176 = vld [vmem:[%s2 + $0x28] sm:$0xf]
    %v177 = vld [vmem:[%s2 + $0x2c] sm:$0xf]
    %v178 = vld [vmem:[%s2 + $0x30] sm:$0xf]
    %v179 = vld [vmem:[%s2 + $0x34] sm:$0xf]
    %v180 = vld [vmem:[%s2 + $0x38] sm:$0xf]
    %v181 = vld [vmem:[%s2 + $0x3c] sm:$0xf]
    %v182 = vtanh.pop %v162
    %v183 = vtanh.pop %v164
    %184 = vst [vmem:[#allocation2] sm:$0x1] %v182
    %185 = vst [vmem:[#allocation2 + $0x8] sm:$0x1] %v183
    %v186 = vpack.c.bf16 %v182, %v182
    %v187 = vpack.c.bf16 %v183, %v183
    %v190 = vunpack.c.l.b16 %v186
    %v191 = vunpack.c.l.b16 %v187
    %v192 = vrot.slane %v191, 7
    %vm193 = vcmask 1041409
    %v194 = vsel %vm193, %v192, %v190
    %v195 = vpack.c.b16 %v194, %v194
    %v213 = vunpack.c.l.b16 %v166
    %v214 = vunpack.c.l.b16 %v167
    %v215 = vunpack.c.l.b16 %v168
    %v216 = vunpack.c.l.b16 %v169
    %v217 = vunpack.c.l.b16 %v170
    %v218 = vunpack.c.l.b16 %v171
    %v219 = vunpack.c.l.b16 %v172
    %v220 = vunpack.c.l.b16 %v173
    %v221 = vunpack.c.l.b16 %v174
    %v222 = vunpack.c.l.b16 %v175
    %v223 = vunpack.c.l.b16 %v176
    %v224 = vunpack.c.l.b16 %v177
    %v225 = vunpack.c.l.b16 %v178
    %v226 = vunpack.c.l.b16 %v179
    %v227 = vunpack.c.l.b16 %v180
    %v228 = vunpack.c.l.b16 %v181
    %v229 = vpack.c.b16 %v214, %v213
    %v230 = vpack.c.b16 %v216, %v215
    %v231 = vpack.c.b16 %v218, %v217
    %v232 = vpack.c.b16 %v220, %v219
    %v233 = vpack.c.b16 %v222, %v221
    %v234 = vpack.c.b16 %v224, %v223
    %v235 = vpack.c.b16 %v226, %v225
    %v236 = vpack.c.b16 %v228, %v227
    %245 = vmatpush.bf16.msra.mxu0 %v236
    %246 = vmatpush.bf16.msra.mxu0 %v235
    %247 = vmatpush.bf16.msra.mxu0 %v234
    %248 = vmatpush.bf16.msra.mxu0 %v233
    %249 = vmatpush.bf16.msra.mxu0 %v232
    %250 = vmatpush.bf16.msra.mxu0 %v231
    %251 = vmatpush.bf16.msra.mxu0 %v230
    %252 = vmatpush.bf16.msra.mxu0 %v229
    %253 = vmatmul.bf16.gmra.mxu0 %v195
    %v254 = vpop.f32.mrf.mxu0
    %v255 = vadd.f32 0.0, %v254
    %v256 = vpop.f32.mrf.mxu0
    %257 = vdwg.mxu0
    %v259 = vrot.slane %v255, 7
    %v262 = vadd.f32 %v162, %v259
    %v263 = vadd.f32 %v164, %v255
    %v264 = vtanh.pop %v262
    %v265 = vtanh.pop %v263
    %266 = vst [vmem:[#allocation2] sm:$0x2] %v264
    %267 = vst [vmem:[#allocation2 + $0x8] sm:$0x2] %v265
    %v268 = vpack.c.bf16 %v264, %v264
    %v269 = vpack.c.bf16 %v265, %v265
    %v272 = vunpack.c.l.b16 %v268
    %v273 = vunpack.c.l.b16 %v269
    %v274 = vrot.slane %v272, 1
    %v275 = vsel %vm193, %v273, %v274
    %v276 = vpack.c.b16 %v275, %v275
    %278 = vmatpush.bf16.msra.mxu0 %v236
    %279 = vmatpush.bf16.msra.mxu0 %v235
    %280 = vmatpush.bf16.msra.mxu0 %v234
    %281 = vmatpush.bf16.msra.mxu0 %v233
    %282 = vmatpush.bf16.msra.mxu0 %v232
    %283 = vmatpush.bf16.msra.mxu0 %v231
    %284 = vmatpush.bf16.msra.mxu0 %v230
    %285 = vmatpush.bf16.msra.mxu0 %v229
    %286 = vmatmul.bf16.gmra.mxu0 %v276
    %v287 = vpop.f32.mrf.mxu0
    %v288 = vadd.f32 0.0, %v287
    %v289 = vpop.f32.mrf.mxu0
    %290 = vdwg.mxu0
    %v292 = vrot.slane %v288, 6
    %v293 = vrot.slane %v288, 7
    %v296 = vadd.f32 %v162, %v292
    %v297 = vadd.f32 %v164, %v293
    %v298 = vtanh.pop %v296
    %v299 = vtanh.pop %v297
    %300 = vst [vmem:[#allocation2] sm:$0x4] %v298
    %301 = vst [vmem:[#allocation2 + $0x8] sm:$0x4] %v299
    %v302 = vpack.c.bf16 %v298, %v298
    %v303 = vpack.c.bf16 %v299, %v299
    %v306 = vunpack.c.l.b16 %v302
    %v307 = vunpack.c.l.b16 %v303
    %v308 = vrot.slane %v306, 2
    %v309 = vrot.slane %v307, 1
    %v310 = vsel %vm193, %v309, %v308
    %v311 = vpack.c.b16 %v310, %v310
    %313 = vmatpush.bf16.msra.mxu0 %v236
    %314 = vmatpush.bf16.msra.mxu0 %v235
    %315 = vmatpush.bf16.msra.mxu0 %v234
    %316 = vmatpush.bf16.msra.mxu0 %v233
    %317 = vmatpush.bf16.msra.mxu0 %v232
    %318 = vmatpush.bf16.msra.mxu0 %v231
    %319 = vmatpush.bf16.msra.mxu0 %v230
    %320 = vmatpush.bf16.msra.mxu0 %v229
    %321 = vmatmul.bf16.gmra.mxu0 %v311
    %v322 = vpop.f32.mrf.mxu0
    %v323 = vadd.f32 0.0, %v322
    %v324 = vpop.f32.mrf.mxu0
    %325 = vdwg.mxu0
    %v327 = vrot.slane %v323, 5
    %v328 = vrot.slane %v323, 6
    %v331 = vadd.f32 %v162, %v327
    %v332 = vadd.f32 %v164, %v328
    %v333 = vtanh.pop %v331
    %v334 = vtanh.pop %v332
    %335 = vst [vmem:[#allocation2] sm:$0x8] %v333
    %336 = vst [vmem:[#allocation2 + $0x8] sm:$0x8] %v334
    %v337 = vpack.c.bf16 %v333, %v333
    %v338 = vpack.c.bf16 %v334, %v334
    %v341 = vunpack.c.l.b16 %v337
    %v342 = vunpack.c.l.b16 %v338
    %v343 = vrot.slane %v341, 3
    %v344 = vrot.slane %v342, 2
    %v345 = vsel %vm193, %v344, %v343
    %v346 = vpack.c.b16 %v345, %v345
    %348 = vmatpush.bf16.msra.mxu0 %v236
    %349 = vmatpush.bf16.msra.mxu0 %v235
    %350 = vmatpush.bf16.msra.mxu0 %v234
    %351 = vmatpush.bf16.msra.mxu0 %v233
    %352 = vmatpush.bf16.msra.mxu0 %v232
    %353 = vmatpush.bf16.msra.mxu0 %v231
    %354 = vmatpush.bf16.msra.mxu0 %v230
    %355 = vmatpush.bf16.msra.mxu0 %v229
    %356 = vmatmul.bf16.gmra.mxu0 %v346
    %v357 = vpop.f32.mrf.mxu0
    %v358 = vadd.f32 0.0, %v357
    %v359 = vpop.f32.mrf.mxu0
    %360 = vdwg.mxu0
    %v362 = vrot.slane %v358, 4
    %v363 = vrot.slane %v358, 5
    %v366 = vadd.f32 %v162, %v362
    %v367 = vadd.f32 %v164, %v363
    %v368 = vtanh.pop %v366
    %v369 = vtanh.pop %v367
    %370 = vst [vmem:[#allocation2] sm:$0x10] %v368
    %371 = vst [vmem:[#allocation2 + $0x8] sm:$0x10] %v369
    %v372 = vpack.c.bf16 %v368, %v368
    %v373 = vpack.c.bf16 %v369, %v369
    %v376 = vunpack.c.l.b16 %v372
    %v377 = vunpack.c.l.b16 %v373
    %v378 = vrot.slane %v376, 4
    %v379 = vrot.slane %v377, 3
    %v380 = vsel %vm193, %v379, %v378
    %v381 = vpack.c.b16 %v380, %v380
    %383 = vmatpush.bf16.msra.mxu0 %v236
    %384 = vmatpush.bf16.msra.mxu0 %v235
    %385 = vmatpush.bf16.msra.mxu0 %v234
    %386 = vmatpush.bf16.msra.mxu0 %v233
    %387 = vmatpush.bf16.msra.mxu0 %v232
    %388 = vmatpush.bf16.msra.mxu0 %v231
    %389 = vmatpush.bf16.msra.mxu0 %v230
    %390 = vmatpush.bf16.msra.mxu0 %v229
    %391 = vmatmul.bf16.gmra.mxu0 %v381
    %v392 = vpop.f32.mrf.mxu0
    %v393 = vadd.f32 0.0, %v392
    %v394 = vpop.f32.mrf.mxu0
    %395 = vdwg.mxu0
    %v397 = vrot.slane %v393, 3
    %v398 = vrot.slane %v393, 4
    %v401 = vadd.f32 %v162, %v397
    %v402 = vadd.f32 %v164, %v398
    %v403 = vtanh.pop %v401
    %v404 = vtanh.pop %v402
    %405 = vst [vmem:[#allocation2] sm:$0x20] %v403
    %406 = vst [vmem:[#allocation2 + $0x8] sm:$0x20] %v404
    %v407 = vpack.c.bf16 %v403, %v403
    %v408 = vpack.c.bf16 %v404, %v404
    %v411 = vunpack.c.l.b16 %v407
    %v412 = vunpack.c.l.b16 %v408
    %v413 = vrot.slane %v411, 5
    %v414 = vrot.slane %v412, 4
    %v415 = vsel %vm193, %v414, %v413
    %v416 = vpack.c.b16 %v415, %v415
    %418 = vmatpush.bf16.msra.mxu0 %v236
    %419 = vmatpush.bf16.msra.mxu0 %v235
    %420 = vmatpush.bf16.msra.mxu0 %v234
    %421 = vmatpush.bf16.msra.mxu0 %v233
    %422 = vmatpush.bf16.msra.mxu0 %v232
    %423 = vmatpush.bf16.msra.mxu0 %v231
    %424 = vmatpush.bf16.msra.mxu0 %v230
    %425 = vmatpush.bf16.msra.mxu0 %v229
    %426 = vmatmul.bf16.gmra.mxu0 %v416
    %v427 = vpop.f32.mrf.mxu0
    %v428 = vadd.f32 0.0, %v427
    %v429 = vpop.f32.mrf.mxu0
    %430 = vdwg.mxu0
    %v432 = vrot.slane %v428, 2
    %v433 = vrot.slane %v428, 3
    %v436 = vadd.f32 %v162, %v432
    %v437 = vadd.f32 %v164, %v433
    %v438 = vtanh.pop %v436
    %v439 = vtanh.pop %v437
    %440 = vst [vmem:[#allocation2] sm:$0x40] %v438
    %441 = vst [vmem:[#allocation2 + $0x8] sm:$0x40] %v439
    %v442 = vpack.c.bf16 %v438, %v438
    %v443 = vpack.c.bf16 %v439, %v439
    %v446 = vunpack.c.l.b16 %v442
    %v447 = vunpack.c.l.b16 %v443
    %v448 = vrot.slane %v446, 6
    %v449 = vrot.slane %v447, 5
    %v450 = vsel %vm193, %v449, %v448
    %v451 = vpack.c.b16 %v450, %v450
    %453 = vmatpush.bf16.msra.mxu0 %v236
    %454 = vmatpush.bf16.msra.mxu0 %v235
    %455 = vmatpush.bf16.msra.mxu0 %v234
    %456 = vmatpush.bf16.msra.mxu0 %v233
    %457 = vmatpush.bf16.msra.mxu0 %v232
    %458 = vmatpush.bf16.msra.mxu0 %v231
    %459 = vmatpush.bf16.msra.mxu0 %v230
    %460 = vmatpush.bf16.msra.mxu0 %v229
    %461 = vmatmul.bf16.gmra.mxu0 %v451
    %v462 = vpop.f32.mrf.mxu0
    %v463 = vadd.f32 0.0, %v462
    %v464 = vpop.f32.mrf.mxu0
    %465 = vdwg.mxu0
    %v467 = vrot.slane %v463, 1
    %v468 = vrot.slane %v463, 2
    %v471 = vadd.f32 %v162, %v467
    %v472 = vadd.f32 %v164, %v468
    %v473 = vtanh.pop %v471
    %v474 = vtanh.pop %v472
    %475 = vst [vmem:[#allocation2] sm:$0x80] %v473
    %476 = vst [vmem:[#allocation2 + $0x8] sm:$0x80] %v474
    %v477 = vld [vmem:[#allocation2] sm:$0xff]
    %v478 = vld [vmem:[#allocation2 + $0x8] sm:$0xff]
    %v479 = vpack.c.bf16 %v477, %v477
    %v480 = vpack.c.bf16 %v478, %v478
    %v481 = vld [vmem:[%s3] sm:$0xf]
    %v482 = vld [vmem:[%s3 + $0x4] sm:$0xf]
    %v483 = vld [vmem:[%s3 + $0x8] sm:$0xf]
    %v484 = vld [vmem:[%s3 + $0xc] sm:$0xf]
    %v485 = vld [vmem:[%s3 + $0x10] sm:$0xf]
    %v486 = vld [vmem:[%s3 + $0x14] sm:$0xf]
    %v487 = vld [vmem:[%s3 + $0x18] sm:$0xf]
    %v488 = vld [vmem:[%s3 + $0x1c] sm:$0xf]
    %v489 = vld [vmem:[%s3 + $0x20] sm:$0xf]
    %v490 = vld [vmem:[%s3 + $0x24] sm:$0xf]
    %v491 = vld [vmem:[%s3 + $0x28] sm:$0xf]
    %v492 = vld [vmem:[%s3 + $0x2c] sm:$0xf]
    %v493 = vld [vmem:[%s3 + $0x30] sm:$0xf]
    %v494 = vld [vmem:[%s3 + $0x34] sm:$0xf]
    %v495 = vld [vmem:[%s3 + $0x38] sm:$0xf]
    %v496 = vld [vmem:[%s3 + $0x3c] sm:$0xf]
    %v499 = vunpack.c.l.b16 %v479
    %v500 = vunpack.c.l.b16 %v480
    %v501 = vpack.c.b16 %v500, %v499
    %v519 = vunpack.c.l.b16 %v481
    %v520 = vunpack.c.l.b16 %v482
    %v521 = vunpack.c.l.b16 %v483
    %v522 = vunpack.c.l.b16 %v484
    %v523 = vunpack.c.l.b16 %v485
    %v524 = vunpack.c.l.b16 %v486
    %v525 = vunpack.c.l.b16 %v487
    %v526 = vunpack.c.l.b16 %v488
    %v527 = vunpack.c.l.b16 %v489
    %v528 = vunpack.c.l.b16 %v490
    %v529 = vunpack.c.l.b16 %v491
    %v530 = vunpack.c.l.b16 %v492
    %v531 = vunpack.c.l.b16 %v493
    %v532 = vunpack.c.l.b16 %v494
    %v533 = vunpack.c.l.b16 %v495
    %v534 = vunpack.c.l.b16 %v496
    %v535 = vpack.c.b16 %v520, %v519
    %v536 = vpack.c.b16 %v522, %v521
    %v537 = vpack.c.b16 %v524, %v523
    %v538 = vpack.c.b16 %v526, %v525
    %v539 = vpack.c.b16 %v528, %v527
    %v540 = vpack.c.b16 %v530, %v529
    %v541 = vpack.c.b16 %v532, %v531
    %v542 = vpack.c.b16 %v534, %v533
    %551 = vmatpush.bf16.msra.mxu0 %v542
    %552 = vmatpush.bf16.msra.mxu0 %v541
    %553 = vmatpush.bf16.msra.mxu0 %v540
    %554 = vmatpush.bf16.msra.mxu0 %v539
    %555 = vmatpush.bf16.msra.mxu0 %v538
    %556 = vmatpush.bf16.msra.mxu0 %v537
    %557 = vmatpush.bf16.msra.mxu0 %v536
    %558 = vmatpush.bf16.msra.mxu0 %v535
    %559 = vmatmul.bf16.gmra.mxu0 %v501
    %v560 = vpop.f32.mrf.mxu0
    %v561 = vadd.f32 0.0, %v560
    %v562 = vpop.f32.mrf.mxu0
    %v563 = vadd.f32 0.0, %v562
    %564 = vdwg.mxu0
    %v565 = vand.u32 2147483647, %v561
    %vm566 = vcmp.le.f32.partialorder %v565, 0.7853982
    %vm567 = vcmp.lt.s32.totalorder %v561, 0
    %v568 = vand.u32 %v561, 2139095040
    %v569 = vshrl.u32 %v568, 23
    %v570 = vsub.s32 %v569, 127
    %v571 = vand.u32 2147483647, %v561
    %v572 = vand.u32 %v571, 8388607
    %v573 = vor.u32 %v572, 8388608
    %v574 = vsub.s32 0, %v573
    %v575 = vadd.s32 %v570, 1
    %vm576 = vcmp.gt.s32.totalorder %v575, 0
    %v577 = vsel %vm576, %v575, 0
    %v578 = vshrl.u32 %v577, 5
    %v579 = vand.u32 %v577, 31
    %v580 = vsub.s32 32, %v579
    %v581 = vshrl.u32 683565275, %v580
    %v582 = vshll.u32 683565275, %v579
    %v583 = vshrl.u32 2475754826, %v580
    %v584 = vor.u32 %v582, %v583
    %v585 = vshll.u32 2475754826, %v579
    %v586 = vshrl.u32 2131351028, %v580
    %v587 = vor.u32 %v585, %v586
    %v588 = vshll.u32 2131351028, %v579
    %v589 = vshrl.u32 2102212464, %v580
    %v590 = vor.u32 %v588, %v589
    %v591 = vshll.u32 2102212464, %v579
    %v592 = vshrl.u32 920167782, %v580
    %v593 = vor.u32 %v591, %v592
    %v594 = vshll.u32 920167782, %v579
    %v595 = vshrl.u32 1326507024, %v580
    %v596 = vor.u32 %v594, %v595
    %vm597 = vcmp.lt.s32.totalorder %v578, 1
    %vm598 = vcmp.lt.s32.totalorder %v578, 2
    %vm599 = vcmp.lt.s32.totalorder %v578, 3
    %vm600 = vcmp.lt.s32.totalorder %v578, 4
    %v601 = vsel %vm597, %v581, %v584
    %v602 = vsel %vm600, %v590, 2102212464
    %v603 = vsel %vm599, %v587, %v602
    %v604 = vsel %vm598, %v601, %v603
    %v605 = vsel %vm597, %v584, %v587
    %v606 = vsel %vm600, %v593, 920167782
    %v607 = vsel %vm599, %v590, %v606
    %v608 = vsel %vm598, %v605, %v607
    %v609 = vsel %vm597, %v587, %v590
    %v610 = vsel %vm600, %v596, 1326507024
    %v611 = vsel %vm599, %v593, %v610
    %v612 = vsel %vm598, %v609, %v611
    %v613 = vshll.u32 %v573, 8
    %v614 = vand.u32 %v613, 65535
    %v615 = vshrl.u32 %v613, 16
    %v616 = vand.u32 %v612, 65535
    %v617 = vshrl.u32 %v612, 16
    %v618 = vmul.u32 %v614, %v616
    %v619 = vmul.u32 %v614, %v617
    %v620 = vmul.u32 %v615, %v616
    %v621 = vmul.u32 %v615, %v617
    %v622 = vshll.u32 %v619, 16
    %v623 = vshrl.u32 %v619, 16
    %v624 = vshll.u32 %v620, 16
    %v625 = vshrl.u32 %v620, 16
    %vm626 = vc.u32 %v618, %v622
    %v627 = vsel %vm626, 1, 0
    %v628 = vadd.s32 %v618, %v622
    %v629 = vadd.s32 %v621, %v627
    %vm630 = vc.u32 %v628, %v624
    %v631 = vsel %vm630, 1, 0
    %v632 = vadd.s32 %v628, %v624
    %v633 = vadd.s32 %v629, %v631
    %v634 = vadd.s32 %v633, %v623
    %v635 = vadd.s32 %v634, %v625
    %v636 = vand.u32 %v613, 65535
    %v637 = vshrl.u32 %v613, 16
    %v638 = vand.u32 %v608, 65535
    %v639 = vshrl.u32 %v608, 16
    %v640 = vmul.u32 %v636, %v638
    %v641 = vmul.u32 %v636, %v639
    %v642 = vmul.u32 %v637, %v638
    %v643 = vmul.u32 %v637, %v639
    %v644 = vshll.u32 %v641, 16
    %v645 = vshrl.u32 %v641, 16
    %v646 = vshll.u32 %v642, 16
    %v647 = vshrl.u32 %v642, 16
    %vm648 = vc.u32 %v640, %v644
    %v649 = vsel %vm648, 1, 0
    %v650 = vadd.s32 %v640, %v644
    %v651 = vadd.s32 %v643, %v649
    %vm652 = vc.u32 %v650, %v646
    %v653 = vsel %vm652, 1, 0
    %v654 = vadd.s32 %v650, %v646
    %v655 = vadd.s32 %v651, %v653
    %v656 = vadd.s32 %v655, %v645
    %v657 = vadd.s32 %v656, %v647
    %v658 = vmul.u32 %v613, %v604
    %v659 = vadd.s32 %v635, %v654
    %vm660 = vc.u32 %v635, %v654
    %v661 = vadd.s32 %v657, 1
    %v662 = vsel %vm660, %v661, %v657
    %v663 = vadd.s32 %v658, %v662
    %v664 = vadd.s32 %v663, 536870912
    %v665 = vshrl.u32 %v664, 30
    %v666 = vshll.u32 %v665, 30
    %v667 = vsub.s32 %v663, %v666
    %vm668 = vcmp.lt.s32.totalorder %v667, 0
    %v669 = vsub.s32 0, %v667
    %v670 = vsel %vm668, %v669, %v667
    %v671 = vclz %v670
    %v672 = vsub.s32 %v671, 2
    %vm673 = vcmp.gt.s32.totalorder 0, %v672
    %v674 = vsel %vm673, 0, %v672
    %v675 = vsub.s32 32, %v674
    %v676 = vshll.u32 %v667, %v674
    %v677 = vshrl.u32 %v659, %v675
    %v678 = vor.u32 %v676, %v677
    %v679 = vsub.s32 4294967266, %v674
    %v680 = vadd.s32 %v679, 127
    %v681 = vshll.u32 %v680, 23
    %v682 = vor.u32 4788187, %v681
    %v683 = vand.u32 2147483647, %v682
    %v685 = vcvt.s32.f32 %v678
    %v686 = vmul.f32 %v685, %v683
    %v687 = vxor.u32 %v686, 2147483648
    %v688 = vsel %vm567, %v687, %v686
    %v689 = vsub.s32 4, %v665
    %v690 = vsel %vm567, %v689, %v665
    %v691 = vsel %vm566, %v561, %v688
    %v692 = vsel %vm566, 0, %v690
    %v693 = vmul.f32 %v691, %v691
    %v694 = vmul.f32 %v693, -0.001358992
    %v695 = vadd.f32 %v694, 0.041655596
    %v696 = vmul.f32 %v693, %v695
    %v697 = vadd.f32 %v696, -0.4999988
    %v698 = vmul.f32 %v693, %v697
    %v699 = vadd.f32 1.0, %v698
    %v700 = vmul.f32 %v691, %v691
    %v701 = vmul.f32 %v700, -0.00019511016
    %v702 = vadd.f32 %v701, 0.008332121
    %v703 = vmul.f32 %v700, %v702
    %v704 = vadd.f32 %v703, -0.16666654
    %v705 = vmul.f32 %v700, %v704
    %v706 = vadd.f32 %v705, 1.0
    %v707 = vmul.f32 %v706, %v691
    %vm708 = vweird.f32 %v561
    %v709 = vadd.s32 %v692, 3
    %v710 = vand.u32 %v709, 3
    %vm711 = vcmp.lt.s32.totalorder %v710, 2
    %vm712 = vcmp.eq.s32.totalorder %v710, 0
    %v713 = vxor.u32 %v707, 2147483648
    %v714 = vsel %vm712, %v699, %v713
    %vm715 = vcmp.eq.s32.totalorder %v710, 2
    %v716 = vxor.u32 %v699, 2147483648
    %v717 = vsel %vm715, %v716, %v707
    %v718 = vsel %vm711, %v714, %v717
    %v719 = vsel %vm708, nan, %v718
    %v720 = vand.u32 2147483647, %v563
    %vm721 = vcmp.le.f32.partialorder %v720, 0.7853982
    %vm722 = vcmp.lt.s32.totalorder %v563, 0
    %v723 = vand.u32 %v563, 2139095040
    %v724 = vshrl.u32 %v723, 23
    %v725 = vsub.s32 %v724, 127
    %v726 = vand.u32 2147483647, %v563
    %v727 = vand.u32 %v726, 8388607
    %v728 = vor.u32 %v727, 8388608
    %v729 = vsub.s32 0, %v728
    %v730 = vadd.s32 %v725, 1
    %vm731 = vcmp.gt.s32.totalorder %v730, 0
    %v732 = vsel %vm731, %v730, 0
    %v733 = vshrl.u32 %v732, 5
    %v734 = vand.u32 %v732, 31
    %v735 = vsub.s32 32, %v734
    %v736 = vshrl.u32 683565275, %v735
    %v737 = vshll.u32 683565275, %v734
    %v738 = vshrl.u32 2475754826, %v735
    %v739 = vor.u32 %v737, %v738
    %v740 = vshll.u32 2475754826, %v734
    %v741 = vshrl.u32 2131351028, %v735
    %v742 = vor.u32 %v740, %v741
    %v743 = vshll.u32 2131351028, %v734
    %v744 = vshrl.u32 2102212464, %v735
    %v745 = vor.u32 %v743, %v744
    %v746 = vshll.u32 2102212464, %v734
    %v747 = vshrl.u32 920167782, %v735
    %v748 = vor.u32 %v746, %v747
    %v749 = vshll.u32 920167782, %v734
    %v750 = vshrl.u32 1326507024, %v735
    %v751 = vor.u32 %v749, %v750
    %vm752 = vcmp.lt.s32.totalorder %v733, 1
    %vm753 = vcmp.lt.s32.totalorder %v733, 2
    %vm754 = vcmp.lt.s32.totalorder %v733, 3
    %vm755 = vcmp.lt.s32.totalorder %v733, 4
    %v756 = vsel %vm752, %v736, %v739
    %v757 = vsel %vm755, %v745, 2102212464
    %v758 = vsel %vm754, %v742, %v757
    %v759 = vsel %vm753, %v756, %v758
    %v760 = vsel %vm752, %v739, %v742
    %v761 = vsel %vm755, %v748, 920167782
    %v762 = vsel %vm754, %v745, %v761
    %v763 = vsel %vm753, %v760, %v762
    %v764 = vsel %vm752, %v742, %v745
    %v765 = vsel %vm755, %v751, 1326507024
    %v766 = vsel %vm754, %v748, %v765
    %v767 = vsel %vm753, %v764, %v766
    %v768 = vshll.u32 %v728, 8
    %v769 = vand.u32 %v768, 65535
    %v770 = vshrl.u32 %v768, 16
    %v771 = vand.u32 %v767, 65535
    %v772 = vshrl.u32 %v767, 16
    %v773 = vmul.u32 %v769, %v771
    %v774 = vmul.u32 %v769, %v772
    %v775 = vmul.u32 %v770, %v771
    %v776 = vmul.u32 %v770, %v772
    %v777 = vshll.u32 %v774, 16
    %v778 = vshrl.u32 %v774, 16
    %v779 = vshll.u32 %v775, 16
    %v780 = vshrl.u32 %v775, 16
    %vm781 = vc.u32 %v773, %v777
    %v782 = vsel %vm781, 1, 0
    %v783 = vadd.s32 %v773, %v777
    %v784 = vadd.s32 %v776, %v782
    %vm785 = vc.u32 %v783, %v779
    %v786 = vsel %vm785, 1, 0
    %v787 = vadd.s32 %v783, %v779
    %v788 = vadd.s32 %v784, %v786
    %v789 = vadd.s32 %v788, %v778
    %v790 = vadd.s32 %v789, %v780
    %v791 = vand.u32 %v768, 65535
    %v792 = vshrl.u32 %v768, 16
    %v793 = vand.u32 %v763, 65535
    %v794 = vshrl.u32 %v763, 16
    %v795 = vmul.u32 %v791, %v793
    %v796 = vmul.u32 %v791, %v794
    %v797 = vmul.u32 %v792, %v793
    %v798 = vmul.u32 %v792, %v794
    %v799 = vshll.u32 %v796, 16
    %v800 = vshrl.u32 %v796, 16
    %v801 = vshll.u32 %v797, 16
    %v802 = vshrl.u32 %v797, 16
    %vm803 = vc.u32 %v795, %v799
    %v804 = vsel %vm803, 1, 0
    %v805 = vadd.s32 %v795, %v799
    %v806 = vadd.s32 %v798, %v804
    %vm807 = vc.u32 %v805, %v801
    %v808 = vsel %vm807, 1, 0
    %v809 = vadd.s32 %v805, %v801
    %v810 = vadd.s32 %v806, %v808
    %v811 = vadd.s32 %v810, %v800
    %v812 = vadd.s32 %v811, %v802
    %v813 = vmul.u32 %v768, %v759
    %v814 = vadd.s32 %v790, %v809
    %vm815 = vc.u32 %v790, %v809
    %v816 = vadd.s32 %v812, 1
    %v817 = vsel %vm815, %v816, %v812
    %v818 = vadd.s32 %v813, %v817
    %v819 = vadd.s32 %v818, 536870912
    %v820 = vshrl.u32 %v819, 30
    %v821 = vshll.u32 %v820, 30
    %v822 = vsub.s32 %v818, %v821
    %vm823 = vcmp.lt.s32.totalorder %v822, 0
    %v824 = vsub.s32 0, %v822
    %v825 = vsel %vm823, %v824, %v822
    %v826 = vclz %v825
    %v827 = vsub.s32 %v826, 2
    %vm828 = vcmp.gt.s32.totalorder 0, %v827
    %v829 = vsel %vm828, 0, %v827
    %v830 = vsub.s32 32, %v829
    %v831 = vshll.u32 %v822, %v829
    %v832 = vshrl.u32 %v814, %v830
    %v833 = vor.u32 %v831, %v832
    %v834 = vsub.s32 4294967266, %v829
    %v835 = vadd.s32 %v834, 127
    %v836 = vshll.u32 %v835, 23
    %v837 = vor.u32 4788187, %v836
    %v838 = vand.u32 2147483647, %v837
    %v840 = vcvt.s32.f32 %v833
    %v841 = vmul.f32 %v840, %v838
    %v842 = vxor.u32 %v841, 2147483648
    %v843 = vsel %vm722, %v842, %v841
    %v844 = vsub.s32 4, %v820
    %v845 = vsel %vm722, %v844, %v820
    %v846 = vsel %vm721, %v563, %v843
    %v847 = vsel %vm721, 0, %v845
    %v848 = vmul.f32 %v846, %v846
    %v849 = vmul.f32 %v848, -0.001358992
    %v850 = vadd.f32 %v849, 0.041655596
    %v851 = vmul.f32 %v848, %v850
    %v852 = vadd.f32 %v851, -0.4999988
    %v853 = vmul.f32 %v848, %v852
    %v854 = vadd.f32 1.0, %v853
    %v855 = vmul.f32 %v846, %v846
    %v856 = vmul.f32 %v855, -0.00019511016
    %v857 = vadd.f32 %v856, 0.008332121
    %v858 = vmul.f32 %v855, %v857
    %v859 = vadd.f32 %v858, -0.16666654
    %v860 = vmul.f32 %v855, %v859
    %v861 = vadd.f32 %v860, 1.0
    %v862 = vmul.f32 %v861, %v846
    %vm863 = vweird.f32 %v563
    %v864 = vadd.s32 %v847, 3
    %v865 = vand.u32 %v864, 3
    %vm866 = vcmp.lt.s32.totalorder %v865, 2
    %vm867 = vcmp.eq.s32.totalorder %v865, 0
    %v868 = vxor.u32 %v862, 2147483648
    %v869 = vsel %vm867, %v854, %v868
    %vm870 = vcmp.eq.s32.totalorder %v865, 2
    %v871 = vxor.u32 %v854, 2147483648
    %v872 = vsel %vm870, %v871, %v862
    %v873 = vsel %vm866, %v869, %v872
    %v874 = vsel %vm863, nan, %v873
    %875 = vst [vmem:[#allocation6] sm:$0xff] %v719
    %876 = vst [vmem:[#allocation6 + $0x8] sm:$0xff] %v874
    // Predicated region
    $region22: #{overfit_control_plane_forward.1} parent=1 // pred_check
      _
    $region23: #{overfit_control_plane_forward.1} parent=1 // pred_check_branch
      %878 = sbr.rel (0) target = $region25
    $region24: #{overfit_control_plane_forward.1} parent=1 // pred_region
      %880 = vsyncadd [#allocation5], 0
      %s881 = sshll.u32 [#allocation6], 4
      %s882 = int_to_ptr.vmem [resolvable:$true] %s881
      %s883 = sshll.u32 %s4, 4
      %s884 = int_to_ptr.hbm [resolvable:$true] %s883
      %889 = dma.vmem_to_hbm [thread:$0]  %s882, 256, %s884, [#allocation5], 128, 128, 8
    $region25: #{overfit_control_plane_forward.1} parent=1 // pred_fallthru
      _
    // Predicated region
    $region26: #{overfit_control_plane_forward.1} parent=1 // pred_check
      _
    $region27: #{overfit_control_plane_forward.1} parent=1 // pred_check_branch
      %891 = sbr.rel (0) target = $region29
    $region28: #{overfit_control_plane_forward.1} parent=1 // pred_region
      %893 = dma.done [#allocation5], 256
    $region29: #{overfit_control_plane_forward.1} parent=1 // pred_fallthru
      _
    %894 = vsyncpa [#allocation4], 1
    %895 = vsyncpa [#allocation5], 1

</llo_original>
